<compile_context>
chip_gen: v7x
topology: tpu7x:2x2x1
jax: 0.10.0
libtpu: 0.0.40
codegen_flags: <defaults>
</compile_context>

<pallas_src>
import functools

import jax
import jax.numpy as jnp
from jax.experimental import pallas as pl
from jax.experimental.pallas import tpu as pltpu

ALPHA = 0.5
GAMMA = 4
LANES = 128
SUBLANES = 8
ROW_ALIGN = 32  # keeps block rows legal for f32 / bf16 / int8 sublane packing


def _round_up(x, m):
    return ((x + m - 1) // m) * m


def _cdiv(a, b):
    return -(-a // b)


def _device_kind():
    try:
        return jax.devices()[0].device_kind.lower()
    except Exception:
        return ""


def _tpu_defaults(kind):
    """(num_tensorcores, max_rows_per_tile) tuned per TPU generation."""
    if "v7" in kind:
        return 2, 4096   # 2 TCs/chip; 2 MiB f32 blocks
    if "v6" in kind:
        return 1, 4096   # 1 TC; 32 MiB scoped-VMEM default
    return 1, 2048       # v5e & unknown: stay under the 16 MiB scoped default


def _focal_sum_kernel(p_ref, t_ref, out_ref, acc_ref, *, gamma_int, gamma_f,
                      hard_targets, tiles_per_shard, rows_per_tile,
                      valid_rows, needs_mask):
    """Accumulate a per-shard unnormalized focal-loss sum (alpha applied outside)."""
    j = pl.program_id(1)

    @pl.when(j == 0)
    def _():
        acc_ref[...] = jnp.zeros_like(acc_ref)

    # Inputs stream in the caller's dtype (bf16/f32/int); upcast per tile on the VPU.
    p = p_ref[...].astype(jnp.float32)
    t = t_ref[...].astype(jnp.float32)

    if hard_targets:
        # Hard {0,1} targets: one transcendental per element instead of three.
        # pt == exp(-BCE) collapses to the selected probability itself (only
        # divergence is below exp(-100) ~ 3.7e-44, which is negligible).
        pt = jnp.where(t > 0.5, p, 1.0 - p)
        bce = jnp.minimum(-jnp.log(pt), 100.0)
    else:
        # General soft-target path, matching F.binary_cross_entropy exactly.
        # NOTE: the -100 clamp happens BEFORE the t/(1-t) blend -- this is what
        # makes the (p=1, t=1) tail padding contribute exactly 0 instead of
        # 0 * -inf = NaN.  Do not reorder.
        log_p = jnp.maximum(jnp.log(p), -100.0)
        log_1mp = jnp.maximum(jnp.log(1.0 - p), -100.0)
        bce = -(log_1mp + t * (log_p - log_1mp))   # fused: one fewer VALU op
        pt = jnp.exp(-bce)

    one_minus_pt = 1.0 - pt
    if gamma_int is not None:
        w = one_minus_pt ** gamma_int              # static int -> lax.integer_pow (VPU)
    else:
        w = jnp.power(one_minus_pt, jnp.float32(gamma_f))
    f_loss = w * bce                               # alpha hoisted to the finalize step

    if needs_mask:
        # Rows past the true row count (grid overshoot / partial last block) are
        # zeroed here; the (rows_per_tile, 1) iota keeps the mask cheap.
        row0 = (pl.program_id(0) * tiles_per_shard + j) * rows_per_tile
        row_ids = row0 + jax.lax.broadcasted_iota(jnp.int32, (rows_per_tile, 1), 0)
        f_loss = jnp.where(row_ids < valid_rows, f_loss, 0.0)

    # Fold the tile onto an (8, 128) vreg accumulator with VPU adds only.
    acc_ref[...] += jnp.sum(
        f_loss.reshape(rows_per_tile // SUBLANES, SUBLANES, LANES), axis=0)

    @pl.when(j == pl.num_programs(1) - 1)
    def _():
        # Single cross-lane/sublane reduce per shard; scalar lands in SMEM.
        out_ref[0, 0] = jnp.sum(acc_ref[...])


def binary_focal_loss(inputs, targets, *, alpha=ALPHA, gamma=GAMMA,
                      hard_targets=None, max_rows_per_tile=None, num_shards=None):
    """Mean binary focal loss over all elements (inputs are probabilities)."""
    assert inputs.shape == targets.shape
    total_n = inputs.size

    if hard_targets is None:
        hard_targets = bool(jnp.issubdtype(targets.dtype, jnp.integer)
                            or jnp.issubdtype(targets.dtype, jnp.bool_))
    if jnp.issubdtype(targets.dtype, jnp.bool_):
        targets = targets.astype(jnp.float32)      # avoid 1-bit block layouts

    g = float(gamma)
    gamma_int = int(g) if g.is_integer() else None  # non-integer gamma -> float pow

    kind = _device_kind()
    default_shards, default_rows = _tpu_defaults(kind)
    if num_shards is None:
        num_shards = default_shards
    if max_rows_per_tile is None:
        max_rows_per_tile = default_rows

    # Keep the caller's dtype (no f32 upcast copies in HBM); flatten is free.
    p_flat = inputs.reshape(-1)
    t_flat = targets.reshape(-1)

    # Only pad so the flat array reshapes to a (rows, 128) slab with rows % 8 == 0.
    # This copies the tensors ONLY when total_n is not a multiple of 1024; all
    # grid/shard alignment overshoot is handled in-kernel by masking (zero-copy).
    pad = (-total_n) % (SUBLANES * LANES)
    if pad:
        # (p=1, t=1) contributes exactly zero focal loss (see kernel NOTE).
        p_flat = jnp.concatenate([p_flat, jnp.ones((pad,), p_flat.dtype)])
        t_flat = jnp.concatenate([t_flat, jnp.ones((pad,), t_flat.dtype)])
    rows = (total_n + pad) // LANES                 # always a multiple of 8

    if num_shards > 1 and rows < num_shards * ROW_ALIGN:
        num_shards = 1                              # not enough work to split

    # Balanced tiling: fewest tiles whose (rounded) tile fits the VMEM budget;
    # the overshoot is < ROW_ALIGN rows per tile and is masked in-kernel.
    tiles_per_shard = max(1, _cdiv(rows, num_shards * max_rows_per_tile))
    rows_per_tile = min(
        _round_up(_cdiv(rows, num_shards * tiles_per_shard), ROW_ALIGN), rows)
    grid_rows = num_shards * tiles_per_shard * rows_per_tile
    needs_mask = grid_rows != rows
    last_block = _cdiv(rows, rows_per_tile) - 1     # clamp target for OOB grid steps

    p2d = p_flat.reshape(rows, LANES)
    t2d = t_flat.reshape(rows, LANES)

    kernel = functools.partial(
        _focal_sum_kernel,
        gamma_int=gamma_int, gamma_f=g, hard_targets=hard_targets,
        tiles_per_shard=tiles_per_shard, rows_per_tile=rows_per_tile,
        valid_rows=rows, needs_mask=needs_mask)

    def in_idx(s, j):
        # Clamp so grid overshoot never requests a fully out-of-bounds block;
        # those steps are fully masked inside the kernel anyway.
        return (jnp.minimum(s * tiles_per_shard + j, last_block), 0)

    if num_shards > 1:
        # Real 2-TensorCore split (v7x-class chips); plain "parallel" does not
        # change codegen, CORE_PARALLEL does.
        dim_sem = (pltpu.CORE_PARALLEL, pltpu.ARBITRARY)
    else:
        dim_sem = ("arbitrary", "arbitrary")

    # Only raise the scoped-VMEM limit when using tiles larger than the
    # previously validated 2048-row configuration (48 MiB fits every generation).
    vmem_limit = (48 << 20) if rows_per_tile > 2048 else None

    partials = pl.pallas_call(
        kernel,
        out_shape=jax.ShapeDtypeStruct((num_shards, 1), jnp.float32),
        grid_spec=pltpu.PrefetchScalarGridSpec(
            num_scalar_prefetch=0,
            grid=(num_shards, tiles_per_shard),
            in_specs=[
                pl.BlockSpec((rows_per_tile, LANES), in_idx),
                pl.BlockSpec((rows_per_tile, LANES), in_idx),
            ],
            out_specs=pl.BlockSpec((1, 1), lambda s, j: (s, 0),
                                   memory_space=pltpu.SMEM),
            scratch_shapes=[pltpu.VMEM((SUBLANES, LANES), jnp.float32)],
        ),
        compiler_params=pltpu.CompilerParams(
            dimension_semantics=dim_sem,
            vmem_limit_bytes=vmem_limit,
        ),
    )(p2d, t2d)

    # Combine per-shard partials, apply hoisted alpha, normalize by TRUE count.
    return (jnp.float32(alpha) * jnp.sum(partials)) / jnp.float32(total_n)


def binary_focal_loss_ref(inputs, targets, *, alpha=ALPHA, gamma=GAMMA):
    """Pure-JAX reference mirroring the PyTorch module."""
    p = inputs.astype(jnp.float32)
    t = targets.astype(jnp.float32)
    bce = -(t * jnp.maximum(jnp.log(p), -100.0)
            + (1.0 - t) * jnp.maximum(jnp.log(1.0 - p), -100.0))
    pt = jnp.exp(-bce)
    return jnp.mean(alpha * (1.0 - pt) ** gamma * bce)


if __name__ == "__main__":
    key = jax.random.PRNGKey(0)
    k1, k2, k3, k4, k5, k6 = jax.random.split(key, 6)

    # 1) Spec-shaped NCHW probabilities with hard-valued float targets.
    x1 = jax.random.uniform(k1, (2, 4, 16, 16), dtype=jnp.float32,
                            minval=0.01, maxval=0.99)
    y1 = (jax.random.uniform(k2, (2, 4, 16, 16), dtype=jnp.float32) > 0.5
          ).astype(jnp.float32)
    out1 = jax.block_until_ready(binary_focal_loss(x1, y1))
    ref1 = binary_focal_loss_ref(x1, y1)
    assert jnp.allclose(out1, ref1, rtol=1e-5, atol=1e-6), (out1, ref1)

    # 2) Larger soft-target case: multi-tile sequential accumulation, zero-copy.
    x2 = jax.random.uniform(k3, (2, 8, 160, 160), dtype=jnp.float32,
                            minval=0.01, maxval=0.99)
    y2 = jax.random.uniform(k4, (2, 8, 160, 160), dtype=jnp.float32)
    out2 = jax.block_until_ready(binary_focal_loss(x2, y2))
    ref2 = binary_focal_loss_ref(x2, y2)
    assert jnp.allclose(out2, ref2, rtol=1e-5, atol=1e-6), (out2, ref2)

    # 3) bf16 inputs + integer hard targets + forced small tiles: exercises the
    #    no-upcast path, the hard-target fast path and the in-kernel row mask.
    x3 = jax.random.uniform(k5, (2, 4, 129, 128), dtype=jnp.float32,
                            minval=0.01, maxval=0.99).astype(jnp.bfloat16)
    y3 = (jax.random.uniform(k6, (2, 4, 129, 128), dtype=jnp.float32) > 0.5
          ).astype(jnp.int32)
    out3 = jax.block_until_ready(binary_focal_loss(x3, y3, max_rows_per_tile=256))
    ref3 = binary_focal_loss_ref(x3.astype(jnp.float32), y3.astype(jnp.float32))
    assert jnp.allclose(out3, ref3, rtol=2e-5, atol=1e-6), (out3, ref3)

    # 4) Ragged total (not a multiple of 1024): exercises the zero-contribution
    #    (p=1, t=1) tail padding path.
    x4 = jax.random.uniform(k1, (3, 5, 7, 11), dtype=jnp.float32,
                            minval=0.01, maxval=0.99)
    y4 = jax.random.uniform(k2, (3, 5, 7, 11), dtype=jnp.float32)
    out4 = jax.block_until_ready(binary_focal_loss(x4, y4))
    ref4 = binary_focal_loss_ref(x4, y4)
    assert jnp.allclose(out4, ref4, rtol=1e-5, atol=1e-6), (out4, ref4)

    print("KERNEL_OK")
</pallas_src>

<mosaic_0001>
module attributes {stable_mosaic.version = 11 : i64} {
  func.func @_focal_sum_kernel(%arg0: i32, %arg1: i32, %arg2: memref<16x128xf32, #tpu.memory_space<vmem>>, %arg3: memref<16x128xf32, #tpu.memory_space<vmem>>, %arg4: memref<1x1xf32, #tpu.memory_space<smem>>, %arg5: memref<8x128xf32, #tpu.memory_space<vmem>>) attributes {dimension_semantics = [#tpu.dimension_semantics<arbitrary>, #tpu.dimension_semantics<arbitrary>], iteration_bounds = array<i64: 1, 1>, scalar_prefetch = 0 : i64, scratch_operands = 1 : i64, tpu.core_type = #tpu.core_type<tc>, window_params = [{transform_indices = @transform_0, window_bounds = array<i64: 16, 128>}, {transform_indices = @transform_1, window_bounds = array<i64: 16, 128>}, {transform_indices = @transform_2, window_bounds = array<i64: 1, 1>}]} {
    %c0_i32 = arith.constant 0 : i32
    %0 = arith.cmpi eq, %arg1, %c0_i32 : i32
    %1 = arith.extui %0 : i1 to i32
    %c0_i32_0 = arith.constant 0 : i32
    %2 = arith.cmpi ne, %1, %c0_i32_0 : i32
    scf.if %2 {
      %cst_16 = arith.constant 0.000000e+00 : f32
      %34 = vector.broadcast %cst_16 : f32 to vector<8x128xf32>
      %c0_17 = arith.constant 0 : index
      %c0_18 = arith.constant 0 : index
      %35 = vector.load %arg5[%c0_17, %c0_18] : memref<8x128xf32, #tpu.memory_space<vmem>>, vector<8x128xf32>
      tpu.vector_store %arg5[%c0_17, %c0_18], %34 {strides = array<i32>} : memref<8x128xf32, #tpu.memory_space<vmem>>, vector<8x128xf32>,
    } else {
    }
    %c0 = arith.constant 0 : index
    %c0_1 = arith.constant 0 : index
    %3 = vector.load %arg2[%c0, %c0_1] : memref<16x128xf32, #tpu.memory_space<vmem>>, vector<16x128xf32>
    %c0_2 = arith.constant 0 : index
    %c0_3 = arith.constant 0 : index
    %4 = vector.load %arg3[%c0_2, %c0_3] : memref<16x128xf32, #tpu.memory_space<vmem>>, vector<16x128xf32>
    %5 = math.log %3 : vector<16x128xf32>
    %cst = arith.constant -1.000000e+02 : f32
    %6 = vector.broadcast %cst : f32 to vector<16x128xf32>
    %7 = arith.maximumf %5, %6 : vector<16x128xf32>
    %cst_4 = arith.constant 1.000000e+00 : f32
    %8 = vector.broadcast %cst_4 : f32 to vector<16x128xf32>
    %9 = arith.subf %8, %3 : vector<16x128xf32>
    %10 = math.log %9 : vector<16x128xf32>
    %cst_5 = arith.constant -1.000000e+02 : f32
    %11 = vector.broadcast %cst_5 : f32 to vector<16x128xf32>
    %12 = arith.maximumf %10, %11 : vector<16x128xf32>
    %13 = arith.subf %7, %12 : vector<16x128xf32>
    %14 = arith.mulf %4, %13 : vector<16x128xf32>
    %15 = arith.addf %12, %14 : vector<16x128xf32>
    %cst_6 = arith.constant 0.000000e+00 : f32
    %16 = vector.broadcast %cst_6 : f32 to vector<16x128xf32>
    %17 = arith.subf %16, %15 : vector<16x128xf32>
    %cst_7 = arith.constant 0.000000e+00 : f32
    %18 = vector.broadcast %cst_7 : f32 to vector<16x128xf32>
    %19 = arith.subf %18, %17 : vector<16x128xf32>
    %20 = math.exp %19 : vector<16x128xf32>
    %cst_8 = arith.constant 1.000000e+00 : f32
    %21 = vector.broadcast %cst_8 : f32 to vector<16x128xf32>
    %22 = arith.subf %21, %20 : vector<16x128xf32>
    %23 = arith.mulf %22, %22 : vector<16x128xf32>
    %24 = arith.mulf %23, %23 : vector<16x128xf32>
    %25 = arith.mulf %24, %17 : vector<16x128xf32>
    %c0_9 = arith.constant 0 : index
    %c0_10 = arith.constant 0 : index
    %26 = vector.load %arg5[%c0_9, %c0_10] : memref<8x128xf32, #tpu.memory_space<vmem>>, vector<8x128xf32>
    %27 = vector.shape_cast %25 : vector<16x128xf32> to vector<2x8x128xf32>
    %cst_11 = arith.constant dense<0.000000e+00> : vector<8x128xf32>
    %28 = vector.multi_reduction <add>, %27, %cst_11 [0] : vector<2x8x128xf32> to vector<8x128xf32>
    %29 = arith.addf %26, %28 : vector<8x128xf32>
    %c0_12 = arith.constant 0 : index
    %c0_13 = arith.constant 0 : index
    %30 = vector.load %arg5[%c0_12, %c0_13] : memref<8x128xf32, #tpu.memory_space<vmem>>, vector<8x128xf32>
    tpu.vector_store %arg5[%c0_12, %c0_13], %29 {strides = array<i32>} : memref<8x128xf32, #tpu.memory_space<vmem>>, vector<8x128xf32>,
    %c0_i32_14 = arith.constant 0 : i32
    %31 = arith.cmpi eq, %arg1, %c0_i32_14 : i32
    %32 = arith.extui %31 : i1 to i32
    %c0_i32_15 = arith.constant 0 : i32
    %33 = arith.cmpi ne, %32, %c0_i32_15 : i32
    scf.if %33 {
      %c0_16 = arith.constant 0 : index
      %c0_17 = arith.constant 0 : index
      %34 = vector.load %arg5[%c0_16, %c0_17] : memref<8x128xf32, #tpu.memory_space<vmem>>, vector<8x128xf32>
      %35 = vector.shape_cast %34 : vector<8x128xf32> to vector<1x8x128xf32>
      %cst_18 = arith.constant dense<0.000000e+00> : vector<1xf32>
      %36 = vector.multi_reduction <add>, %35, %cst_18 [1, 2] : vector<1x8x128xf32> to vector<1xf32>
      %37 = vector.shape_cast %36 : vector<1xf32> to vector<1x1x1xf32>
      %38 = vector.extract %37[0, 0, 0] : f32 from vector<1x1x1xf32>
      %c0_19 = arith.constant 0 : index
      %c0_20 = arith.constant 0 : index
      %39 = memref.load %arg4[%c0_19, %c0_20] : memref<1x1xf32, #tpu.memory_space<smem>>
      memref.store %38, %arg4[%c0_19, %c0_20] : memref<1x1xf32, #tpu.memory_space<smem>>
    } else {
    }
    return
  }
  func.func @transform_0(%arg0: i32, %arg1: i32) -> (i32, i32) {
    %c1_i32 = arith.constant 1 : i32
    %0 = arith.muli %arg0, %c1_i32 : i32
    %1 = arith.addi %0, %arg1 : i32
    %c0_i32 = arith.constant 0 : i32
    %2 = arith.minsi %1, %c0_i32 : i32
    %c0_i32_0 = arith.constant 0 : i32
    %c0_i32_1 = arith.constant 0 : i32
    return %2, %c0_i32_0 : i32, i32
  }
  func.func @transform_1(%arg0: i32, %arg1: i32) -> (i32, i32) {
    %c1_i32 = arith.constant 1 : i32
    %0 = arith.muli %arg0, %c1_i32 : i32
    %1 = arith.addi %0, %arg1 : i32
    %c0_i32 = arith.constant 0 : i32
    %2 = arith.minsi %1, %c0_i32 : i32
    %c0_i32_0 = arith.constant 0 : i32
    %c0_i32_1 = arith.constant 0 : i32
    return %2, %c0_i32_0 : i32, i32
  }
  func.func @transform_2(%arg0: i32, %arg1: i32) -> (i32, i32) {
    %c0_i32 = arith.constant 0 : i32
    %c0_i32_0 = arith.constant 0 : i32
    return %arg0, %c0_i32 : i32, i32
  }
}

</mosaic_0001>

<llo_original>
// kernel: tpu_custom_call.1
$region0: #{tpu_custom_call.1}
  #allocation0 [shape = 'u32[]', space=smem, size = 0x4, offset = 0x4, fixed_abs, tag = 'smem constant byte address 0x4 - core index']
  #allocation1 [shape = 'u32[144,128]{1,0:T(1,128)}', space=vmem, size = 0x12000, scoped, tag = 'internal scratch']
  #allocation2 [shape = 'f32[8,128]{1,0:T(8,128)}', space=vmem, size = 0x1000, scoped, tag = 'scratch operand']
  %s0 = inlined_call_operand.hbm [shape: f32[16,128], index: 0, kind: input, shape index: {}]
  %s1 = inlined_call_operand.hbm [shape: f32[16,128], index: 1, kind: input, shape index: {}]
  %s2 = inlined_call_operand.hbm [shape: f32[1,1], index: 2, kind: output, shape index: {}]
  %s3 = sld [smem:[#allocation0]]
  $region34: #{tpu_custom_call.1} parent=0
    _
  %s5 = ssub.s32 1, %s3
  %s6 = scalar_select 0, %s5, %s3
  $region1: #{tpu_custom_call.1} parent=0
    #allocation3 [shape = 'u8[8192]{0}', space=vmem, size = 0x2000, scoped, tag = 'input window, operand 0, single buffered']
    #allocation4 [shape = 's32[1]{0}', space=sflag, size = 0x4, scoped, tag = 'scoped memory for tpu_custom_call.1']
    #allocation5 [shape = 's32[1]{0}', space=sflag, size = 0x4, scoped, tag = 'scoped memory for tpu_custom_call.1']
    #allocation6 [shape = 'u8[8192]{0}', space=vmem, size = 0x2000, scoped, tag = 'input window, operand 1, single buffered']
    #allocation7 [shape = 's32[1]{0}', space=sflag, size = 0x4, scoped, tag = 'scoped memory for tpu_custom_call.1']
    #allocation8 [shape = 'u8[512]{0}', space=smem, size = 0x200, scoped, tag = 'output window, operand 0, single buffered']
    %7 = vsyncpa [#allocation4], 0
    %8 = vsyncpa [#allocation7], 0
    %9 = vsyncpa [#allocation5], 0
    // Predicated region
    $region2: #{tpu_custom_call.1} parent=1 // pred_check
      _
    $region3: #{tpu_custom_call.1} parent=1 // pred_check_branch
      %11 = sbr.rel (0) target = $region5
    $region4: #{tpu_custom_call.1} parent=1 // pred_region
      %s12 = sadd.s32 0, 0
      %p13 = scmp.lt.s32.totalorder %s12, 0
      %s14 = scalar_select %p13, %s12, 0
      %s15 = smul.u32 2, %s14
      %s17 = ssub.s32 256, 256
      %18 = vsyncadd [#allocation4], %s17
      %s19 = smul.addr %s15, 128
      %s20 = scalar_lea.hbm %s0, %s19
      %s21 = sshll.u32 [#allocation3], 4
      %s22 = int_to_ptr.vmem [resolvable:$true] %s21
      %27 = dma.hbm_to_vmem [thread:$0]  %s20, 256, %s22, [#allocation4], 128, 128, 8
    $region5: #{tpu_custom_call.1} parent=1 // pred_fallthru
      _
    // Predicated region
    $region6: #{tpu_custom_call.1} parent=1 // pred_check
      _
    $region7: #{tpu_custom_call.1} parent=1 // pred_check_branch
      %29 = sbr.rel (0) target = $region9
    $region8: #{tpu_custom_call.1} parent=1 // pred_region
      %s30 = sadd.s32 0, 0
      %p31 = scmp.lt.s32.totalorder %s30, 0
      %s32 = scalar_select %p31, %s30, 0
      %s33 = smul.u32 2, %s32
      %s35 = ssub.s32 256, 256
      %36 = vsyncadd [#allocation7], %s35
      %s37 = smul.addr %s33, 128
      %s38 = scalar_lea.hbm %s1, %s37
      %s39 = sshll.u32 [#allocation6], 4
      %s40 = int_to_ptr.vmem [resolvable:$true] %s39
      %45 = dma.hbm_to_vmem [thread:$0]  %s38, 256, %s40, [#allocation7], 128, 128, 8
    $region9: #{tpu_custom_call.1} parent=1 // pred_fallthru
      _
    // Predicated region
    $region10: #{tpu_custom_call.1} parent=1 // pred_check
      _
    $region11: #{tpu_custom_call.1} parent=1 // pred_check_branch
      %47 = sbr.rel (0) target = $region13
    $region12: #{tpu_custom_call.1} parent=1 // pred_region
      %48 = dma.done [#allocation4], 256
    $region13: #{tpu_custom_call.1} parent=1 // pred_fallthru
      _
    // Predicated region
    $region14: #{tpu_custom_call.1} parent=1 // pred_check
      _
    $region15: #{tpu_custom_call.1} parent=1 // pred_check_branch
      %50 = sbr.rel (0) target = $region17
    $region16: #{tpu_custom_call.1} parent=1 // pred_region
      %51 = dma.done [#allocation7], 256
    $region17: #{tpu_custom_call.1} parent=1 // pred_fallthru
      _
    %s52 = sadd.s32 0, 0
    %p53 = scmp.lt.s32.totalorder %s52, 0
    %s54 = scalar_select %p53, %s52, 0
    %s55 = smul.u32 2, %s54
    %s56 = sadd.s32 0, 0
    %p57 = scmp.lt.s32.totalorder %s56, 0
    %s58 = scalar_select %p57, %s56, 0
    %s59 = smul.u32 2, %s58
    %p60 = scmp.eq.s32.totalorder 0, 0
    // Predicated region
    $region18: #{tpu_custom_call.1} parent=1 // pred_check
      %p61 = pneg %p60
    $region19: #{tpu_custom_call.1} parent=1 // pred_check_branch
      %63 = sbr.rel (%p61) target = $region21
    $region20: #{tpu_custom_call.1} parent=1 // pred_region
      %64 = vst [vmem:[#allocation2] sm:$0xff] 0.0
    $region21: #{tpu_custom_call.1} parent=1 // pred_fallthru
      _
    %v65 = vld [vmem:[#allocation3] sm:$0xff]
    %v66 = vld [vmem:[#allocation3 + $0x8] sm:$0xff]
    %v67 = vld [vmem:[#allocation6] sm:$0xff]
    %v68 = vld [vmem:[#allocation6 + $0x8] sm:$0xff]
    %v69 = vlog2.pop %v65
    %v70 = vmul.f32 %v69, 0.6931472
    %v71 = vlog2.pop %v66
    %v72 = vmul.f32 %v71, 0.6931472
    %v73 = vmax.f32 %v70, -100.0
    %v74 = vmax.f32 %v72, -100.0
    %v75 = vsub.f32 1.0, %v65
    %v76 = vsub.f32 1.0, %v66
    %v77 = vlog2.pop %v75
    %v78 = vmul.f32 %v77, 0.6931472
    %v79 = vlog2.pop %v76
    %v80 = vmul.f32 %v79, 0.6931472
    %v81 = vmax.f32 %v78, -100.0
    %v82 = vmax.f32 %v80, -100.0
    %v83 = vsub.f32 %v73, %v81
    %v84 = vsub.f32 %v74, %v82
    %v85 = vmul.f32 %v67, %v83
    %v86 = vmul.f32 %v68, %v84
    %v87 = vadd.f32 %v81, %v85
    %v88 = vadd.f32 %v82, %v86
    %v89 = vsub.f32 0.0, %v87
    %v90 = vsub.f32 0.0, %v88
    %v91 = vsub.f32 0.0, %v89
    %v92 = vsub.f32 0.0, %v90
    %v93 = vmul.f32 %v91, 1.442695
    %v94 = vpow.pop %v93
    %v95 = vmul.f32 %v92, 1.442695
    %v96 = vpow.pop %v95
    %v97 = vsub.f32 1.0, %v94
    %v98 = vsub.f32 1.0, %v96
    %v99 = vmul.f32 %v97, %v97
    %v100 = vmul.f32 %v98, %v98
    %v101 = vmul.f32 %v99, %v99
    %v102 = vmul.f32 %v100, %v100
    %v103 = vmul.f32 %v101, %v89
    %v104 = vmul.f32 %v102, %v90
    %v105 = vld [vmem:[#allocation2] sm:$0xff]
    %v106 = vadd.f32 %v103, %v104
    %v107 = vadd.f32 %v105, %v106
    %108 = vst [vmem:[#allocation2] sm:$0xff] %v107
    // Predicated region
    $region22: #{tpu_custom_call.1} parent=1 // pred_check
      %p109 = pneg %p60
    $region23: #{tpu_custom_call.1} parent=1 // pred_check_branch
      %111 = sbr.rel (%p109) target = $region25
    $region24: #{tpu_custom_call.1} parent=1 // pred_region
      %v112 = vld [vmem:[#allocation2] sm:$0xff]
      %113 = vadd.xlane.f32.xlu0 %v112
      %v114 = vpop.xlane.xlu0 %113
      %v115 = vrot.slane %v114, 4
      %v116 = vadd.f32 %v114, %v115
      %v117 = vrot.slane %v116, 2
      %v118 = vadd.f32 %v116, %v117
      %v119 = vrot.slane %v118, 1
      %v120 = vadd.f32 %v118, %v119
      %s121 = vtos %v120
      %s122 = scalar_lea.smem [#allocation8], 0
      %123 = sst [smem:[%s122]] %s121
    $region25: #{tpu_custom_call.1} parent=1 // pred_fallthru
      _
    // Predicated region
    $region26: #{tpu_custom_call.1} parent=1 // pred_check
      _
    $region27: #{tpu_custom_call.1} parent=1 // pred_check_branch
      %125 = sbr.rel (0) target = $region29
    $region28: #{tpu_custom_call.1} parent=1 // pred_region
      %s127 = ssub.s32 16, 16
      %128 = vsyncadd [#allocation5], %s127
      %131 = dma.smem_to_hbm [#allocation8], 16, %s2, [#allocation5]
    $region29: #{tpu_custom_call.1} parent=1 // pred_fallthru
      _
    // Predicated region
    $region30: #{tpu_custom_call.1} parent=1 // pred_check
      _
    $region31: #{tpu_custom_call.1} parent=1 // pred_check_branch
      %133 = sbr.rel (0) target = $region33
    $region32: #{tpu_custom_call.1} parent=1 // pred_region
      %134 = dma.done [#allocation5], 16
    $region33: #{tpu_custom_call.1} parent=1 // pred_fallthru
      _
    %135 = sfence
    %136 = vsyncpa [#allocation4], 1
    %137 = vsyncpa [#allocation7], 1
    %138 = vsyncpa [#allocation5], 1

</llo_original>
